<compile_context>
chip_gen: v7x
topology: tpu7x:2x2x1
jax: 0.10.0
libtpu: 0.0.40
codegen_flags: <defaults>
</compile_context>

<pallas_src>
import functools
import math

import jax
import jax.numpy as jnp
from jax import lax
from jax.experimental import pallas as pl
from jax.experimental.pallas import tpu as pltpu


_VMEM_LIMIT = 32 * 1024 * 1024  # safe on v5e/v6e/v7x; actual usage is far lower


# ----------------------------------------------------------------------------
# Helpers
# ----------------------------------------------------------------------------
def _pad_to_tiles(x, tiles):
    """Zero-pad each dim of x up to a multiple of the corresponding tile."""
    pads = [(0, (-d) % t) for d, t in zip(x.shape, tiles)]
    if all(p == (0, 0) for p in pads):
        return x
    return jnp.pad(x, pads)


def _pick_tile(dim, target, align):
    """Largest tile <= target that divides dim and is a multiple of `align`.

    Returns dim itself when dim <= target (a full-extent block is always legal).
    Falls back to `target` (padding path) only if no aligned divisor exists, which
    never happens for standard BERT shapes -> _pad_to_tiles stays a no-op.
    """
    if dim <= target:
        return dim
    t = (target // align) * align
    while t >= align:
        if dim % t == 0:
            return t
        t -= align
    return target


# ----------------------------------------------------------------------------
# Tiled matmul kernel:  out = act(x @ w + b)
# ----------------------------------------------------------------------------
def _matmul_kernel(x_ref, w_ref, b_ref, o_ref, acc_ref, *, activation):
    @pl.when(pl.program_id(2) == 0)
    def _():
        acc_ref[...] = jnp.zeros_like(acc_ref)

    acc_ref[...] += jnp.dot(x_ref[...], w_ref[...],
                            preferred_element_type=jnp.float32)

    @pl.when(pl.program_id(2) == pl.num_programs(2) - 1)
    def _():
        y = acc_ref[...] + b_ref[...]                       # f32 epilogue
        if activation == "gelu":
            # original BERT gelu: x * 0.5 * (1 + erf(x / sqrt(2)))
            y = y * 0.5 * (1.0 + lax.erf(y * (1.0 / math.sqrt(2.0))))
        o_ref[...] = y.astype(o_ref.dtype)


def pallas_matmul(x, w, b, activation=None, out_dtype=jnp.bfloat16,
                  tm=512, tn=512, tk=512):
    """x: [M, K], w: [K, N], b: [N] -> act(x @ w + b), bf16 MXU / f32 accumulate."""
    M, K = x.shape
    K2, N = w.shape
    assert K == K2
    tm = _pick_tile(M, tm, 8)
    tn = _pick_tile(N, tn, 128)
    tk = _pick_tile(K, tk, 128)

    xp = _pad_to_tiles(x.astype(jnp.bfloat16), (tm, tk))
    wp = _pad_to_tiles(w.astype(jnp.bfloat16), (tk, tn))
    bp = _pad_to_tiles(b.reshape(1, N).astype(jnp.float32), (1, tn))
    Mp, Kp = xp.shape
    Np = wp.shape[1]

    out = pl.pallas_call(
        functools.partial(_matmul_kernel, activation=activation),
        out_shape=jax.ShapeDtypeStruct((Mp, Np), out_dtype),
        grid=(Mp // tm, Np // tn, Kp // tk),
        in_specs=[
            pl.BlockSpec((tm, tk), lambda i, j, k: (i, k)),
            pl.BlockSpec((tk, tn), lambda i, j, k: (k, j)),
            pl.BlockSpec((1, tn), lambda i, j, k: (0, j)),
        ],
        out_specs=pl.BlockSpec((tm, tn), lambda i, j, k: (i, j)),
        scratch_shapes=[pltpu.VMEM((tm, tn), jnp.float32)],
        compiler_params=pltpu.CompilerParams(
            dimension_semantics=("parallel", "parallel", "arbitrary"),
            vmem_limit_bytes=_VMEM_LIMIT,
        ),
    )(xp, wp, bp)
    if (Mp, Np) != (M, N):
        out = out[:M, :N]
    return out


# ----------------------------------------------------------------------------
# Fused matmul + bias + residual-add + LayerNorm  (out last dim kept whole = H)
# ----------------------------------------------------------------------------
def _matmul_res_ln_kernel(x_ref, w_ref, b_ref, r_ref, g_ref, bb_ref,
                          o_ref, acc_ref, *, eps):
    @pl.when(pl.program_id(1) == 0)
    def _():
        acc_ref[...] = jnp.zeros_like(acc_ref)

    acc_ref[...] += jnp.dot(x_ref[...], w_ref[...],
                            preferred_element_type=jnp.float32)

    @pl.when(pl.program_id(1) == pl.num_programs(1) - 1)
    def _():
        y = acc_ref[...] + b_ref[...] + r_ref[...].astype(jnp.float32)
        u = jnp.mean(y, axis=-1, keepdims=True)
        yc = y - u
        var = jnp.mean(yc * yc, axis=-1, keepdims=True)
        yn = yc * lax.rsqrt(var + eps)
        o_ref[...] = (g_ref[...] * yn + bb_ref[...]).astype(o_ref.dtype)


def pallas_matmul_res_ln(x, w, b, residual, gamma, beta, eps=1e-12,
                         out_dtype=jnp.bfloat16, tm=512, tk=512):
    """LayerNorm((x @ w + b) + residual).  w: [K, H], H kept whole for the reduction
    so the output store stays lane-dense (full multiple-of-128 width)."""
    M, K = x.shape
    K2, H = w.shape
    assert K == K2 and residual.shape == (M, H)
    tm = _pick_tile(M, tm, 8)
    tk = _pick_tile(K, tk, 128)

    xp = _pad_to_tiles(x.astype(jnp.bfloat16), (tm, tk))
    wp = _pad_to_tiles(w.astype(jnp.bfloat16), (tk, H))
    rp = _pad_to_tiles(residual.astype(jnp.bfloat16), (tm, H))
    Mp, Kp = xp.shape

    out = pl.pallas_call(
        functools.partial(_matmul_res_ln_kernel, eps=eps),
        out_shape=jax.ShapeDtypeStruct((Mp, H), out_dtype),
        grid=(Mp // tm, Kp // tk),
        in_specs=[
            pl.BlockSpec((tm, tk), lambda i, k: (i, k)),
            pl.BlockSpec((tk, H), lambda i, k: (k, 0)),
            pl.BlockSpec((1, H), lambda i, k: (0, 0)),
            pl.BlockSpec((tm, H), lambda i, k: (i, 0)),
            pl.BlockSpec((1, H), lambda i, k: (0, 0)),
            pl.BlockSpec((1, H), lambda i, k: (0, 0)),
        ],
        out_specs=pl.BlockSpec((tm, H), lambda i, k: (i, 0)),
        scratch_shapes=[pltpu.VMEM((tm, H), jnp.float32)],
        compiler_params=pltpu.CompilerParams(
            dimension_semantics=("parallel", "arbitrary"),
            vmem_limit_bytes=_VMEM_LIMIT,
        ),
    )(xp, wp, b.reshape(1, H).astype(jnp.float32), rp,
      gamma.reshape(1, H).astype(jnp.float32),
      beta.reshape(1, H).astype(jnp.float32))
    return out[:M] if Mp != M else out


# ----------------------------------------------------------------------------
# Fused embedding-sum + LayerNorm (word + position + token-type, f32 stats).
# Removes the materialized [B*S, H] `emb` HBM round-trip.
# ----------------------------------------------------------------------------
def _embed_ln_kernel(we_ref, te_ref, pe_ref, g_ref, b_ref, o_ref, *, eps):
    x = (we_ref[...].astype(jnp.float32)
         + te_ref[...].astype(jnp.float32)
         + pe_ref[...].astype(jnp.float32))
    u = jnp.mean(x, axis=-1, keepdims=True)
    xc = x - u
    var = jnp.mean(xc * xc, axis=-1, keepdims=True)
    xn = xc * lax.rsqrt(var + eps)
    o_ref[...] = (g_ref[...] * xn + b_ref[...]).astype(o_ref.dtype)


def pallas_embed_layernorm(we2, te2, pe, gamma, beta, B, S, H,
                           eps=1e-12, out_dtype=jnp.bfloat16):
    """we2/te2: [B*S, H] gathered embeddings; pe: [S, H] position embeddings."""
    return pl.pallas_call(
        functools.partial(_embed_ln_kernel, eps=eps),
        out_shape=jax.ShapeDtypeStruct((B * S, H), out_dtype),
        grid=(B,),
        in_specs=[
            pl.BlockSpec((S, H), lambda b: (b, 0)),
            pl.BlockSpec((S, H), lambda b: (b, 0)),
            pl.BlockSpec((S, H), lambda b: (0, 0)),   # same [S, H] block every step
            pl.BlockSpec((1, H), lambda b: (0, 0)),
            pl.BlockSpec((1, H), lambda b: (0, 0)),
        ],
        out_specs=pl.BlockSpec((S, H), lambda b: (b, 0)),
        compiler_params=pltpu.CompilerParams(
            dimension_semantics=("parallel",),
            vmem_limit_bytes=_VMEM_LIMIT,
        ),
    )(we2, te2, pe,
      gamma.reshape(1, H).astype(jnp.float32),
      beta.reshape(1, H).astype(jnp.float32))


# ----------------------------------------------------------------------------
# Self-attention.
#
# Grouped path (H a multiple of 128): grid = (B, n_groups); the q/k/v column
# blocks of the fused [B*S, 3H] activation are DMA'd directly via three
# BlockSpecs on the same array; output block is (S, group_width) with
# group_width a multiple of 128 (lane-dense store).  Two groups preferred so
# v7x's two TensorCores both get work.
#
# Fallback path (small H): grid = (B,), full (S, 3H) block, head slices inside
# the kernel (previous working version).
# ----------------------------------------------------------------------------
def _attention_heads(q, k, v, mask, dH, scale, out_dtype):
    """Statically-unrolled multi-head attention on contiguous head slices."""
    n_heads = q.shape[-1] // dH
    outs = []
    for h in range(n_heads):                               # static unroll over heads
        qh = q[:, h * dH:(h + 1) * dH]
        kh = k[:, h * dH:(h + 1) * dH]
        vh = v[:, h * dH:(h + 1) * dH]
        s = lax.dot_general(qh, kh, (((1,), (1,)), ((), ())),
                            preferred_element_type=jnp.float32) * scale
        s = s + mask
        s = s - jnp.max(s, axis=-1, keepdims=True)
        p = jnp.exp(s)
        p = p * pl.reciprocal(jnp.sum(p, axis=-1, keepdims=True), approx=True)
        ctx = jnp.dot(p.astype(vh.dtype), vh, preferred_element_type=jnp.float32)
        outs.append(ctx.astype(out_dtype))
    return outs[0] if len(outs) == 1 else jnp.concatenate(outs, axis=-1)


def _attention_kernel_grouped(q_ref, k_ref, v_ref, m_ref, o_ref, *, dH, scale):
    mask = m_ref[0]                                        # [1, S] additive f32
    o_ref[...] = _attention_heads(q_ref[...], k_ref[...], v_ref[...],
                                  mask, dH, scale, o_ref.dtype)


def _attention_kernel_fused(qkv_ref, m_ref, o_ref, *, H, dH, scale):
    qkv = qkv_ref[...]                                     # [S, 3H] bf16
    mask = m_ref[0]                                        # [1, S]
    o_ref[...] = _attention_heads(qkv[:, :H], qkv[:, H:2 * H], qkv[:, 2 * H:],
                                  mask, dH, scale, o_ref.dtype)


def _attn_group_width(H, dH):
    """Group width: multiple of 128 lanes and of dH, dividing H; prefer 2 groups."""
    lcm = 128 * dH // math.gcd(128, dH)
    if H % lcm != 0:
        return None                     # small / odd H -> fused fallback path
    if H > lcm and (H // 2) % lcm == 0:
        return H // 2                   # two groups: balances v7x's 2 TensorCores
    return lcm


def pallas_attention(qkv, ext_mask, B, S, H, nH):
    """qkv: [B*S, 3H] (q|k|v concat on last dim); ext_mask: [B, 1, S] additive."""
    dH = H // nH
    scale = 1.0 / math.sqrt(dH)
    gw = _attn_group_width(H, dH)

    if gw is not None:
        G = H // gw                                        # head groups
        return pl.pallas_call(
            functools.partial(_attention_kernel_grouped, dH=dH, scale=scale),
            out_shape=jax.ShapeDtypeStruct((B * S, H), jnp.bfloat16),
            grid=(B, G),
            in_specs=[
                # Same fused [B*S, 3H] array, three column-block views (Q | K | V).
                pl.BlockSpec((S, gw), lambda b, g: (b, g)),
                pl.BlockSpec((S, gw), lambda b, g: (b, G + g)),
                pl.BlockSpec((S, gw), lambda b, g: (b, 2 * G + g)),
                pl.BlockSpec((1, 1, S), lambda b, g: (b, 0, 0)),
            ],
            out_specs=pl.BlockSpec((S, gw), lambda b, g: (b, g)),
            compiler_params=pltpu.CompilerParams(
                dimension_semantics=("parallel", "parallel"),
                vmem_limit_bytes=_VMEM_LIMIT,
            ),
        )(qkv, qkv, qkv, ext_mask)

    # Fallback: whole-row qkv block, slice heads inside the kernel.
    return pl.pallas_call(
        functools.partial(_attention_kernel_fused, H=H, dH=dH, scale=scale),
        out_shape=jax.ShapeDtypeStruct((B * S, H), jnp.bfloat16),
        grid=(B,),
        in_specs=[
            pl.BlockSpec((S, 3 * H), lambda b: (b, 0)),
            pl.BlockSpec((1, 1, S), lambda b: (b, 0, 0)),
        ],
        out_specs=pl.BlockSpec((S, H), lambda b: (b, 0)),
        compiler_params=pltpu.CompilerParams(
            dimension_semantics=("parallel",),
            vmem_limit_bytes=_VMEM_LIMIT,
        ),
    )(qkv, ext_mask)


# ----------------------------------------------------------------------------
# Parameter init (deterministic, matches init_bert_weights semantics).
# Weights are created directly in bf16 (pre-cast once, never re-written per call).
# ----------------------------------------------------------------------------
def init_params(key, cfg):
    H = cfg["hidden_size"]
    I = cfg["intermediate_size"]
    std = cfg["initializer_range"]
    n_layers = cfg["num_hidden_layers"]

    keys = iter(jax.random.split(key, 5 + 4 * n_layers))

    def normal(shape, dtype=jnp.bfloat16):
        return (std * jax.random.normal(next(keys), shape)).astype(dtype)

    params = {
        "word_emb": normal((cfg["vocab_size"], H)),
        "pos_emb": normal((cfg["max_position_embeddings"], H)),
        "type_emb": normal((cfg["type_vocab_size"], H)),
        "emb_ln_g": jnp.ones((H,), jnp.float32),
        "emb_ln_b": jnp.zeros((H,), jnp.float32),
        "pooler_w": normal((H, H), jnp.float32),
        "pooler_b": jnp.zeros((H,), jnp.float32),
        "cls_w": normal((H, cfg["num_labels"]), jnp.float32),
        "cls_b": jnp.zeros((cfg["num_labels"],), jnp.float32),
        "layers": [],
    }
    for _ in range(n_layers):
        lp = {
            # fused Q|K|V projection weight/bias
            "qkv_w": normal((H, 3 * H)), "qkv_b": jnp.zeros((3 * H,), jnp.float32),
            "ao_w": normal((H, H)), "ao_b": jnp.zeros((H,), jnp.float32),
            "ao_ln_g": jnp.ones((H,), jnp.float32),
            "ao_ln_b": jnp.zeros((H,), jnp.float32),
            "i_w": normal((H, I)), "i_b": jnp.zeros((I,), jnp.float32),
            "o_w": normal((I, H)), "o_b": jnp.zeros((H,), jnp.float32),
            "o_ln_g": jnp.ones((H,), jnp.float32),
            "o_ln_b": jnp.zeros((H,), jnp.float32),
        }
        params["layers"].append(lp)
    return params


# ----------------------------------------------------------------------------
# Model forward
# ----------------------------------------------------------------------------
def bert_layer(x2, ext_mask, lp, cfg, B, S):
    H = cfg["hidden_size"]
    nH = cfg["num_attention_heads"]

    # fused QKV projection: one matmul, N = 3H
    qkv = pallas_matmul(x2, lp["qkv_w"], lp["qkv_b"])              # [B*S, 3H]

    # multi-head self attention straight on the fused layout
    ctx = pallas_attention(qkv, ext_mask, B, S, H, nH)             # [B*S, H]

    # attention output projection + residual + LayerNorm (fused)
    x2 = pallas_matmul_res_ln(ctx, lp["ao_w"], lp["ao_b"],
                              x2, lp["ao_ln_g"], lp["ao_ln_b"])

    # FFN: up-projection with fused gelu, down-projection + residual + LN (fused)
    inter = pallas_matmul(x2, lp["i_w"], lp["i_b"], activation="gelu")
    x2 = pallas_matmul_res_ln(inter, lp["o_w"], lp["o_b"],
                              x2, lp["o_ln_g"], lp["o_ln_b"])
    return x2


def bert_for_sequence_classification(params, cfg, input_ids,
                                     token_type_ids=None, attention_mask=None):
    B, S = input_ids.shape
    H = cfg["hidden_size"]

    if attention_mask is None:
        attention_mask = jnp.ones_like(input_ids)
    if token_type_ids is None:
        token_type_ids = jnp.zeros_like(input_ids)

    # extended additive attention mask: [B, 1, S]
    ext_mask = ((1.0 - attention_mask.astype(jnp.float32)) * -10000.0)[:, None, :]

    # embeddings: gathers in XLA; sum + LayerNorm fused in one row-tiled kernel
    we = jnp.take(params["word_emb"], input_ids, axis=0)           # [B, S, H] bf16
    te = jnp.take(params["type_emb"], token_type_ids, axis=0)      # [B, S, H] bf16
    pe = params["pos_emb"][:S]                                     # [S, H]    bf16
    x2 = pallas_embed_layernorm(we.reshape(B * S, H), te.reshape(B * S, H), pe,
                                params["emb_ln_g"], params["emb_ln_b"],
                                B, S, H)                           # [B*S, H] bf16

    # encoder
    for lp in params["layers"]:
        x2 = bert_layer(x2, ext_mask, lp, cfg, B, S)

    # pooler: first token -> dense -> tanh.  M = B rows only -> plain XLA (a Pallas
    # launch + padded matmul would cost more than the compute here).
    first_tok = x2.reshape(B, S, H)[:, 0, :].astype(jnp.float32)   # [B, H]
    pooled = jnp.tanh(first_tok @ params["pooler_w"] + params["pooler_b"])

    # classifier: tiny N=num_labels output; plain XLA (dropout is identity at
    # inference).
    logits = pooled @ params["cls_w"] + params["cls_b"]
    return logits


# ----------------------------------------------------------------------------
# Main
# ----------------------------------------------------------------------------
if __name__ == "__main__":
    key = jax.random.PRNGKey(0)

    # --- config 1: tiny (exercises the fused small-H attention fallback path) ---
    cfg1 = dict(
        vocab_size=99,
        hidden_size=32,
        num_hidden_layers=2,
        num_attention_heads=4,
        intermediate_size=64,
        max_position_embeddings=64,
        type_vocab_size=2,
        initializer_range=0.02,
        num_labels=3,
    )
    k1, k2, k3, k4 = jax.random.split(key, 4)
    params1 = init_params(k1, cfg1)
    B1, S1 = 2, 8
    ids1 = jax.random.randint(k2, (B1, S1), 0, cfg1["vocab_size"], dtype=jnp.int32)
    logits1 = bert_for_sequence_classification(
        params1, cfg1, ids1, jnp.zeros((B1, S1), jnp.int32),
        jnp.ones((B1, S1), jnp.int32))
    logits1 = jax.block_until_ready(logits1)
    assert logits1.shape == (B1, cfg1["num_labels"])
    assert jnp.all(jnp.isfinite(logits1))

    # --- config 2: H multiple of 128 (exercises the grouped attention path) ---
    cfg2 = dict(
        vocab_size=128,
        hidden_size=256,
        num_hidden_layers=1,
        num_attention_heads=2,
        intermediate_size=512,
        max_position_embeddings=32,
        type_vocab_size=2,
        initializer_range=0.02,
        num_labels=3,
    )
    params2 = init_params(k3, cfg2)
    B2, S2 = 2, 16
    ids2 = jax.random.randint(k4, (B2, S2), 0, cfg2["vocab_size"], dtype=jnp.int32)
    logits2 = bert_for_sequence_classification(
        params2, cfg2, ids2, jnp.zeros((B2, S2), jnp.int32),
        jnp.ones((B2, S2), jnp.int32))
    logits2 = jax.block_until_ready(logits2)
    assert logits2.shape == (B2, cfg2["num_labels"])
    assert jnp.all(jnp.isfinite(logits2))

    print("KERNEL_OK")
</pallas_src>

<mosaic_0001>
module attributes {stable_mosaic.version = 11 : i64} {
  func.func @_embed_ln_kernel(%arg0: i32, %arg1: memref<8x32xbf16, #tpu.memory_space<vmem>>, %arg2: memref<8x32xbf16, #tpu.memory_space<vmem>>, %arg3: memref<8x32xbf16, #tpu.memory_space<vmem>>, %arg4: memref<1x32xf32, #tpu.memory_space<vmem>>, %arg5: memref<1x32xf32, #tpu.memory_space<vmem>>, %arg6: memref<8x32xbf16, #tpu.memory_space<vmem>>) attributes {dimension_semantics = [#tpu.dimension_semantics<parallel>], iteration_bounds = array<i64: 2>, scalar_prefetch = 0 : i64, scratch_operands = 0 : i64, tpu.core_type = #tpu.core_type<tc>, window_params = [{transform_indices = @transform_0, window_bounds = array<i64: 8, 32>}, {transform_indices = @transform_1, window_bounds = array<i64: 8, 32>}, {pipeline_mode = #tpu.pipeline_mode<synchronous>, transform_indices = @transform_2, window_bounds = array<i64: 8, 32>}, {pipeline_mode = #tpu.pipeline_mode<synchronous>, transform_indices = @transform_3, window_bounds = array<i64: 1, 32>}, {pipeline_mode = #tpu.pipeline_mode<synchronous>, transform_indices = @transform_4, window_bounds = array<i64: 1, 32>}, {transform_indices = @transform_5, window_bounds = array<i64: 8, 32>}]} {
    %c0 = arith.constant 0 : index
    %c0_0 = arith.constant 0 : index
    %0 = vector.load %arg1[%c0, %c0_0] : memref<8x32xbf16, #tpu.memory_space<vmem>>, vector<8x32xbf16>
    %1 = arith.extf %0 : vector<8x32xbf16> to vector<8x32xf32>
    %c0_1 = arith.constant 0 : index
    %c0_2 = arith.constant 0 : index
    %2 = vector.load %arg2[%c0_1, %c0_2] : memref<8x32xbf16, #tpu.memory_space<vmem>>, vector<8x32xbf16>
    %3 = arith.extf %2 : vector<8x32xbf16> to vector<8x32xf32>
    %4 = arith.addf %1, %3 : vector<8x32xf32>
    %c0_3 = arith.constant 0 : index
    %c0_4 = arith.constant 0 : index
    %5 = vector.load %arg3[%c0_3, %c0_4] : memref<8x32xbf16, #tpu.memory_space<vmem>>, vector<8x32xbf16>
    %6 = arith.extf %5 : vector<8x32xbf16> to vector<8x32xf32>
    %7 = arith.addf %4, %6 : vector<8x32xf32>
    %cst = arith.constant dense<0.000000e+00> : vector<8xf32>
    %8 = vector.multi_reduction <add>, %7, %cst [1] : vector<8x32xf32> to vector<8xf32>
    %9 = vector.shape_cast %8 : vector<8xf32> to vector<8x1xf32>
    %cst_5 = arith.constant 3.200000e+01 : f32
    %10 = vector.broadcast %cst_5 : f32 to vector<8x1xf32>
    %11 = arith.divf %9, %10 : vector<8x1xf32>
    %12 = vector.broadcast %11 : vector<8x1xf32> to vector<8x32xf32>
    %13 = arith.subf %7, %12 : vector<8x32xf32>
    %14 = arith.mulf %13, %13 : vector<8x32xf32>
    %cst_6 = arith.constant dense<0.000000e+00> : vector<8xf32>
    %15 = vector.multi_reduction <add>, %14, %cst_6 [1] : vector<8x32xf32> to vector<8xf32>
    %16 = vector.shape_cast %15 : vector<8xf32> to vector<8x1xf32>
    %cst_7 = arith.constant 3.200000e+01 : f32
    %17 = vector.broadcast %cst_7 : f32 to vector<8x1xf32>
    %18 = arith.divf %16, %17 : vector<8x1xf32>
    %cst_8 = arith.constant 9.99999996E-13 : f32
    %19 = vector.broadcast %cst_8 : f32 to vector<8x1xf32>
    %20 = arith.addf %18, %19 : vector<8x1xf32>
    %21 = math.rsqrt %20 : vector<8x1xf32>
    %22 = vector.broadcast %21 : vector<8x1xf32> to vector<8x32xf32>
    %23 = arith.mulf %13, %22 : vector<8x32xf32>
    %c0_9 = arith.constant 0 : index
    %c0_10 = arith.constant 0 : index
    %24 = vector.load %arg4[%c0_9, %c0_10] : memref<1x32xf32, #tpu.memory_space<vmem>>, vector<1x32xf32>
    %25 = vector.broadcast %24 : vector<1x32xf32> to vector<8x32xf32>
    %26 = arith.mulf %25, %23 : vector<8x32xf32>
    %c0_11 = arith.constant 0 : index
    %c0_12 = arith.constant 0 : index
    %27 = vector.load %arg5[%c0_11, %c0_12] : memref<1x32xf32, #tpu.memory_space<vmem>>, vector<1x32xf32>
    %28 = vector.broadcast %27 : vector<1x32xf32> to vector<8x32xf32>
    %29 = arith.addf %26, %28 : vector<8x32xf32>
    %30 = arith.truncf %29 : vector<8x32xf32> to vector<8x32xbf16>
    %c0_13 = arith.constant 0 : index
    %c0_14 = arith.constant 0 : index
    %31 = vector.load %arg6[%c0_13, %c0_14] : memref<8x32xbf16, #tpu.memory_space<vmem>>, vector<8x32xbf16>
    tpu.vector_store %arg6[%c0_13, %c0_14], %30 {strides = array<i32>} : memref<8x32xbf16, #tpu.memory_space<vmem>>, vector<8x32xbf16>,
    return
  }
  func.func @transform_0(%arg0: i32) -> (i32, i32) {
    %c0_i32 = arith.constant 0 : i32
    %c0_i32_0 = arith.constant 0 : i32
    return %arg0, %c0_i32 : i32, i32
  }
  func.func @transform_1(%arg0: i32) -> (i32, i32) {
    %c0_i32 = arith.constant 0 : i32
    %c0_i32_0 = arith.constant 0 : i32
    return %arg0, %c0_i32 : i32, i32
  }
  func.func @transform_2(%arg0: i32) -> (i32, i32) {
    %c0_i32 = arith.constant 0 : i32
    %c0_i32_0 = arith.constant 0 : i32
    %c0_i32_1 = arith.constant 0 : i32
    return %c0_i32, %c0_i32_0 : i32, i32
  }
  func.func @transform_3(%arg0: i32) -> (i32, i32) {
    %c0_i32 = arith.constant 0 : i32
    %c0_i32_0 = arith.constant 0 : i32
    %c0_i32_1 = arith.constant 0 : i32
    return %c0_i32, %c0_i32_0 : i32, i32
  }
  func.func @transform_4(%arg0: i32) -> (i32, i32) {
    %c0_i32 = arith.constant 0 : i32
    %c0_i32_0 = arith.constant 0 : i32
    %c0_i32_1 = arith.constant 0 : i32
    return %c0_i32, %c0_i32_0 : i32, i32
  }
  func.func @transform_5(%arg0: i32) -> (i32, i32) {
    %c0_i32 = arith.constant 0 : i32
    %c0_i32_0 = arith.constant 0 : i32
    return %arg0, %c0_i32 : i32, i32
  }
}

</mosaic_0001>

<llo_original>
// kernel: tpu_custom_call.1
$region0: #{tpu_custom_call.1}
  #allocation0 [shape = 'u32[]', space=smem, size = 0x4, offset = 0x4, fixed_abs, tag = 'smem constant byte address 0x4 - core index']
  #allocation1 [shape = 'u32[144,128]{1,0:T(1,128)}', space=vmem, size = 0x12000, scoped, tag = 'internal scratch']
  %s0 = inlined_call_operand.hbm [shape: bf16[16,32], index: 0, kind: input, shape index: {}]
  %s1 = inlined_call_operand.hbm [shape: bf16[16,32], index: 1, kind: input, shape index: {}]
  %s2 = inlined_call_operand.vmem [shape: bf16[8,32], index: 2, kind: input, shape index: {}]
  %s3 = inlined_call_operand.vmem [shape: f32[1,32], index: 3, kind: input, shape index: {}]
  %s4 = inlined_call_operand.vmem [shape: f32[1,32], index: 4, kind: input, shape index: {}]
  %s5 = inlined_call_operand.hbm [shape: bf16[16,32], index: 5, kind: output, shape index: {}]
  %s6 = sld [smem:[#allocation0]]
  $region61: #{tpu_custom_call.1} parent=0
    _
  %s8 = ssub.s32 1, %s6
  %s9 = scalar_select 0, %s8, %s6
  $region1: #{tpu_custom_call.1} parent=0
    #allocation2 [shape = 'u8[4096]{0}', space=vmem, size = 0x1000, scoped, tag = 'input window, operand 0']
    #allocation3 [shape = 's32[2]{0}', space=sflag, size = 0x8, scoped, tag = 'scoped memory for tpu_custom_call.1']
    #allocation4 [shape = 's32[2]{0}', space=sflag, size = 0x8, scoped, tag = 'scoped memory for tpu_custom_call.1']
    #allocation5 [shape = 'u8[4096]{0}', space=vmem, size = 0x1000, scoped, tag = 'input window, operand 1']
    #allocation6 [shape = 's32[2]{0}', space=sflag, size = 0x8, scoped, tag = 'scoped memory for tpu_custom_call.1']
    #allocation7 [shape = 'u8[4096]{0}', space=vmem, size = 0x1000, scoped, tag = 'output window, operand 0']
    %10 = vsyncpa [#allocation3], 0
    %s11 = scalar_lea.sflag [#allocation3], 1
    %12 = vsyncpa %s11, 0
    %13 = vsyncpa [#allocation6], 0
    %s14 = scalar_lea.sflag [#allocation6], 1
    %15 = vsyncpa %s14, 0
    %16 = vsyncpa [#allocation4], 0
    %s17 = scalar_lea.sflag [#allocation4], 1
    %18 = vsyncpa %s17, 0
    loop: start=0, step=1, limit=4
    $region2: #{tpu_custom_call.1} parent=1 // loop_pre_header
      _
    $region3: #{tpu_custom_call.1} parent=1 // loop_header
      %s20 = sphi 0, %s24
      %p21 = scmp.ge.s32.totalorder %s20, 4
      %s30 = sphi 0, %s32
      %s33 = sphi 0, %s30
      %s34 = sphi 0, %s33
      %s50 = sphi 0, %s34
      %s56 = sphi 0, %s58
      %s59 = sphi 0, %s56
      %s60 = sphi 0, %s59
      %s76 = sphi 0, %s60
      %s80 = sphi 0, %s80
      %s82 = sphi 0, %s80
      %s83 = sphi 0, %s82
      %s97 = sphi 0, %s83
      %s101 = sphi 0, %s101
      %s103 = sphi 0, %s101
      %s104 = sphi 0, %s103
      %s118 = sphi 0, %s104
      %s122 = sphi 0, %s122
      %s124 = sphi 0, %s122
      %s125 = sphi 0, %s124
      %s139 = sphi 0, %s125
      %s145 = sphi 0, %s147
      %s148 = sphi 0, %s145
      %s149 = sphi 0, %s148
      %s165 = sphi 0, %s149
    $region4: #{tpu_custom_call.1} parent=1 // loop_header_branch
      %23 = sbr.rel (%p21) target = $region8
    $region5: #{tpu_custom_call.1} parent=1 // loop_body
      %s25 = ssub.s32 %s20, 1
      %s26 = ssub.s32 %s20, 2
      %s27 = sadd.s32 %s20, 1
      %s28 = ssub.s32 %s20, %s27
      %p29 = scmp.eq.s32.totalorder %s28, 0
      %s31 = sadd.s32 %s30, 1
      %s32 = scalar_select %p29, %s30, %s31
      %p35 = pneg %p29
      %p36 = scmp.eq.s32.totalorder %s20, 1
      %p37 = por %p35, %p36
      %p38 = scmp.ne.s32.totalorder %s30, %s33
      %p39 = scmp.eq.s32.totalorder %s20, 0
      %p40 = por %p38, %p39
      %p41 = scmp.ne.s32.totalorder %s30, %s33
      %p42 = scmp.eq.s32.totalorder %s25, 1
      %p43 = por %p41, %p42
      %p44 = scmp.ne.s32.totalorder %s33, %s34
      %p45 = scmp.eq.s32.totalorder %s25, 0
      %p46 = por %p44, %p45
      %p47 = scmp.ne.s32.totalorder %s33, %s34
      %p48 = scmp.eq.s32.totalorder %s26, 1
      %p49 = por %p47, %p48
      %p51 = scmp.ne.s32.totalorder %s34, %s50
      %p52 = scmp.eq.s32.totalorder %s26, 0
      %p53 = por %p51, %p52
      %s54 = ssub.s32 %s20, %s27
      %p55 = scmp.eq.s32.totalorder %s54, 0
      %s57 = sadd.s32 %s56, 1
      %s58 = scalar_select %p55, %s56, %s57
      %p61 = pneg %p55
      %p62 = scmp.eq.s32.totalorder %s20, 1
      %p63 = por %p61, %p62
      %p64 = scmp.ne.s32.totalorder %s56, %s59
      %p65 = scmp.eq.s32.totalorder %s20, 0
      %p66 = por %p64, %p65
      %p67 = scmp.ne.s32.totalorder %s56, %s59
      %p68 = scmp.eq.s32.totalorder %s25, 1
      %p69 = por %p67, %p68
      %p70 = scmp.ne.s32.totalorder %s59, %s60
      %p71 = scmp.eq.s32.totalorder %s25, 0
      %p72 = por %p70, %p71
      %p73 = scmp.ne.s32.totalorder %s59, %s60
      %p74 = scmp.eq.s32.totalorder %s26, 1
      %p75 = por %p73, %p74
      %p77 = scmp.ne.s32.totalorder %s60, %s76
      %p78 = scmp.eq.s32.totalorder %s26, 0
      %p79 = por %p77, %p78
      %s81 = sadd.s32 %s80, 1
      %p84 = scmp.eq.s32.totalorder %s20, 1
      %p85 = scmp.ne.s32.totalorder %s80, %s82
      %p86 = scmp.eq.s32.totalorder %s20, 0
      %p87 = por %p85, %p86
      %p88 = scmp.ne.s32.totalorder %s80, %s82
      %p89 = scmp.eq.s32.totalorder %s25, 1
      %p90 = por %p88, %p89
      %p91 = scmp.ne.s32.totalorder %s82, %s83
      %p92 = scmp.eq.s32.totalorder %s25, 0
      %p93 = por %p91, %p92
      %p94 = scmp.ne.s32.totalorder %s82, %s83
      %p95 = scmp.eq.s32.totalorder %s26, 1
      %p96 = por %p94, %p95
      %p98 = scmp.ne.s32.totalorder %s83, %s97
      %p99 = scmp.eq.s32.totalorder %s26, 0
      %p100 = por %p98, %p99
      %s102 = sadd.s32 %s101, 1
      %p105 = scmp.eq.s32.totalorder %s20, 1
      %p106 = scmp.ne.s32.totalorder %s101, %s103
      %p107 = scmp.eq.s32.totalorder %s20, 0
      %p108 = por %p106, %p107
      %p109 = scmp.ne.s32.totalorder %s101, %s103
      %p110 = scmp.eq.s32.totalorder %s25, 1
      %p111 = por %p109, %p110
      %p112 = scmp.ne.s32.totalorder %s103, %s104
      %p113 = scmp.eq.s32.totalorder %s25, 0
      %p114 = por %p112, %p113
      %p115 = scmp.ne.s32.totalorder %s103, %s104
      %p116 = scmp.eq.s32.totalorder %s26, 1
      %p117 = por %p115, %p116
      %p119 = scmp.ne.s32.totalorder %s104, %s118
      %p120 = scmp.eq.s32.totalorder %s26, 0
      %p121 = por %p119, %p120
      %s123 = sadd.s32 %s122, 1
      %p126 = scmp.eq.s32.totalorder %s20, 1
      %p127 = scmp.ne.s32.totalorder %s122, %s124
      %p128 = scmp.eq.s32.totalorder %s20, 0
      %p129 = por %p127, %p128
      %p130 = scmp.ne.s32.totalorder %s122, %s124
      %p131 = scmp.eq.s32.totalorder %s25, 1
      %p132 = por %p130, %p131
      %p133 = scmp.ne.s32.totalorder %s124, %s125
      %p134 = scmp.eq.s32.totalorder %s25, 0
      %p135 = por %p133, %p134
      %p136 = scmp.ne.s32.totalorder %s124, %s125
      %p137 = scmp.eq.s32.totalorder %s26, 1
      %p138 = por %p136, %p137
      %p140 = scmp.ne.s32.totalorder %s125, %s139
      %p141 = scmp.eq.s32.totalorder %s26, 0
      %p142 = por %p140, %p141
      %s143 = ssub.s32 %s20, %s27
      %p144 = scmp.eq.s32.totalorder %s143, 0
      %s146 = sadd.s32 %s145, 1
      %s147 = scalar_select %p144, %s145, %s146
      %p150 = pneg %p144
      %p151 = scmp.eq.s32.totalorder %s20, 1
      %p152 = por %p150, %p151
      %p153 = scmp.ne.s32.totalorder %s145, %s148
      %p154 = scmp.eq.s32.totalorder %s20, 0
      %p155 = por %p153, %p154
      %p156 = scmp.ne.s32.totalorder %s145, %s148
      %p157 = scmp.eq.s32.totalorder %s25, 1
      %p158 = por %p156, %p157
      %p159 = scmp.ne.s32.totalorder %s148, %s149
      %p160 = scmp.eq.s32.totalorder %s25, 0
      %p161 = por %p159, %p160
      %p162 = scmp.ne.s32.totalorder %s148, %s149
      %p163 = scmp.eq.s32.totalorder %s26, 1
      %p164 = por %p162, %p163
      %p166 = scmp.ne.s32.totalorder %s149, %s165
      %p167 = scmp.eq.s32.totalorder %s26, 0
      %p168 = por %p166, %p167
      %p169 = scmp.le.s32.totalorder 1, %s20
      %p170 = scmp.lt.s32.totalorder %s20, 3
      %p171 = pnand %p169, %p170
      %p172 = pneg %p171
      // Predicated region
      $region9: #{tpu_custom_call.1} parent=5 // pred_check
        _
      $region10: #{tpu_custom_call.1} parent=5 // pred_check_branch
        %174 = sbr.rel (%p171) target = $region12
      $region11: #{tpu_custom_call.1} parent=5 // pred_region
        %s175 = ssub.s32 %s20, 1
        // Predicated region
        $region13: #{tpu_custom_call.1} parent=11 // pred_check
          %p176 = pneg %p93
        $region14: #{tpu_custom_call.1} parent=11 // pred_check_branch
          %178 = sbr.rel (%p176) target = $region16
        $region15: #{tpu_custom_call.1} parent=11 // pred_region
          _
        $region16: #{tpu_custom_call.1} parent=11 // pred_fallthru
          _
        // Predicated region
        $region17: #{tpu_custom_call.1} parent=11 // pred_check
          %p179 = pneg %p114
        $region18: #{tpu_custom_call.1} parent=11 // pred_check_branch
          %181 = sbr.rel (%p179) target = $region20
        $region19: #{tpu_custom_call.1} parent=11 // pred_region
          _
        $region20: #{tpu_custom_call.1} parent=11 // pred_fallthru
          _
        // Predicated region
        $region21: #{tpu_custom_call.1} parent=11 // pred_check
          %p182 = pneg %p135
        $region22: #{tpu_custom_call.1} parent=11 // pred_check_branch
          %184 = sbr.rel (%p182) target = $region24
        $region23: #{tpu_custom_call.1} parent=11 // pred_region
          _
        $region24: #{tpu_custom_call.1} parent=11 // pred_fallthru
          _
      $region12: #{tpu_custom_call.1} parent=5 // pred_fallthru
        _
      %p185 = scmp.lt.s32.totalorder %s20, 2
      // Predicated region
      $region25: #{tpu_custom_call.1} parent=5 // pred_check
        %p186 = pneg %p185
      $region26: #{tpu_custom_call.1} parent=5 // pred_check_branch
        %188 = sbr.rel (%p186) target = $region28
      $region27: #{tpu_custom_call.1} parent=5 // pred_region
        // Predicated region
        $region29: #{tpu_custom_call.1} parent=27 // pred_check
          %p189 = pneg %p40
        $region30: #{tpu_custom_call.1} parent=27 // pred_check_branch
          %191 = sbr.rel (%p189) target = $region32
        $region31: #{tpu_custom_call.1} parent=27 // pred_region
          %s192 = sand.u32 %s30, 1
          %s193 = scalar_lea.sflag [#allocation3], %s192
          %s194 = sand.u32 %s30, 1
          %s195 = smul.addr %s194, 4
          %s196 = scalar_lea.vmem [#allocation2], %s195
          %s198 = ssub.s32 64, 64
          %199 = vsyncadd %s193, %s198
          %s200 = smul.addr %s20, 64
          %s201 = scalar_lea.hbm %s0, %s200
          %s203 = sshll.u32 %s196, 4
          %s204 = int_to_ptr.vmem [resolvable:$true] %s203
          %206 = dma.hbm_to_vmem [thread:$0]  %s201, 64, %s204, %s193
        $region32: #{tpu_custom_call.1} parent=27 // pred_fallthru
          _
        // Predicated region
        $region33: #{tpu_custom_call.1} parent=27 // pred_check
          %p207 = pneg %p66
        $region34: #{tpu_custom_call.1} parent=27 // pred_check_branch
          %209 = sbr.rel (%p207) target = $region36
        $region35: #{tpu_custom_call.1} parent=27 // pred_region
          %s210 = sand.u32 %s56, 1
          %s211 = scalar_lea.sflag [#allocation6], %s210
          %s212 = sand.u32 %s56, 1
          %s213 = smul.addr %s212, 4
          %s214 = scalar_lea.vmem [#allocation5], %s213
          %s216 = ssub.s32 64, 64
          %217 = vsyncadd %s211, %s216
          %s218 = smul.addr %s20, 64
          %s219 = scalar_lea.hbm %s1, %s218
          %s221 = sshll.u32 %s214, 4
          %s222 = int_to_ptr.vmem [resolvable:$true] %s221
          %224 = dma.hbm_to_vmem [thread:$0]  %s219, 64, %s222, %s211
        $region36: #{tpu_custom_call.1} parent=27 // pred_fallthru
          _
      $region28: #{tpu_custom_call.1} parent=5 // pred_fallthru
        _
      %p225 = scmp.le.s32.totalorder 1, %s20
      %p226 = scmp.lt.s32.totalorder %s20, 3
      %p227 = pnand %p225, %p226
      %p228 = pneg %p227
      // Predicated region
      $region37: #{tpu_custom_call.1} parent=5 // pred_check
        _
      $region38: #{tpu_custom_call.1} parent=5 // pred_check_branch
        %230 = sbr.rel (%p227) target = $region40
      $region39: #{tpu_custom_call.1} parent=5 // pred_region
        %s231 = ssub.s32 %s20, 1
        %s232 = sand.u32 %s33, 1
        %s233 = scalar_lea.sflag [#allocation3], %s232
        %s234 = sand.u32 %s33, 1
        %s235 = smul.addr %s234, 4
        %s236 = scalar_lea.vmem [#allocation2], %s235
        // Predicated region
        $region41: #{tpu_custom_call.1} parent=39 // pred_check
          %p237 = pneg %p46
        $region42: #{tpu_custom_call.1} parent=39 // pred_check_branch
          %239 = sbr.rel (%p237) target = $region44
        $region43: #{tpu_custom_call.1} parent=39 // pred_region
          %240 = dma.done %s233, 64
        $region44: #{tpu_custom_call.1} parent=39 // pred_fallthru
          _
        %s241 = sand.u32 %s59, 1
        %s242 = scalar_lea.sflag [#allocation6], %s241
        %s243 = sand.u32 %s59, 1
        %s244 = smul.addr %s243, 4
        %s245 = scalar_lea.vmem [#allocation5], %s244
        // Predicated region
        $region45: #{tpu_custom_call.1} parent=39 // pred_check
          %p246 = pneg %p72
        $region46: #{tpu_custom_call.1} parent=39 // pred_check_branch
          %248 = sbr.rel (%p246) target = $region48
        $region47: #{tpu_custom_call.1} parent=39 // pred_region
          %249 = dma.done %s242, 64
        $region48: #{tpu_custom_call.1} parent=39 // pred_fallthru
          _
        %s250 = sand.u32 %s33, 1
        %s251 = scalar_lea.sflag [#allocation3], %s250
        %s252 = sand.u32 %s33, 1
        %s253 = smul.addr %s252, 4
        %s254 = scalar_lea.vmem [#allocation2], %s253
        %p255 = pneg %p46
        %p256 = pneg %p43
        %s257 = sand.u32 %s59, 1
        %s258 = scalar_lea.sflag [#allocation6], %s257
        %s259 = sand.u32 %s59, 1
        %s260 = smul.addr %s259, 4
        %s261 = scalar_lea.vmem [#allocation5], %s260
        %p262 = pneg %p72
        %p263 = pneg %p69
        %p264 = pneg %p93
        %p265 = pneg %p90
        %p266 = pneg %p114
        %p267 = pneg %p111
        %p268 = pneg %p135
        %p269 = pneg %p132
        %p270 = pneg %p161
        %p271 = pneg %p158
        %s272 = sand.u32 %s148, 1
        %s273 = scalar_lea.sflag [#allocation4], %s272
        %s274 = sand.u32 %s148, 1
        %s275 = smul.addr %s274, 4
        %s276 = scalar_lea.vmem [#allocation7], %s275
        %v277 = vld [vmem:[%s236] sm:$0xf]
        %v278 = vunpack.c.l.bf16 %v277
        %v279 = vld [vmem:[%s245] sm:$0xf]
        %v280 = vunpack.c.l.bf16 %v279
        %v281 = vadd.f32 %v278, %v280
        %v282 = vld [vmem:[%s2] sm:$0xf]
        %v283 = vunpack.c.l.bf16 %v282
        %v284 = vadd.f32 %v281, %v283
        %vm285 = vcmask 261120
        %v286 = vsel %vm285, %v284, 0.0
        %287 = vadd.xlane.f32.xlu0 %v286
        %v288 = vpop.xlane.xlu0 %287
        %v289 = vrcp.pop 32.0
        %v290 = vmul.f32 %v288, %v289
        %v291 = vsub.f32 %v284, %v290
        %v292 = vmul.f32 %v291, %v291
        %v293 = vsel %vm285, %v292, 0.0
        %294 = vadd.xlane.f32.xlu0 %v293
        %v295 = vpop.xlane.xlu0 %294
        %v296 = vmul.f32 %v295, %v289
        %v297 = vadd.f32 %v296, 1e-12
        %v298 = vrsqrt.pop %v297
        %v299 = vmul.f32 %v291, %v298
        %v300 = vld [vmem:[%s3] sm:$0x1]
        %v302 = vlaneseq
        %v303 = vshrl.u32 %v302, 7
        %v304 = vsub.s32 0, %v303
        %v305 = vrot.slane %v300, %v304
        %v307 = vmul.f32 %v305, %v299
        %v308 = vld [vmem:[%s4] sm:$0x1]
        %v310 = vlaneseq
        %v311 = vshrl.u32 %v310, 7
        %v312 = vsub.s32 0, %v311
        %v313 = vrot.slane %v308, %v312
        %v315 = vadd.f32 %v307, %v313
        %v316 = vpack.c.bf16 %v315, %v315
        %vm317 = vcmask 257024
        %318 = vst.msk [vmem:[%s276] sm:$0xf] %vm317, %v316
        %s319 = sand.u32 %s148, 1
        %s320 = scalar_lea.sflag [#allocation4], %s319
        %s321 = sand.u32 %s148, 1
        %s322 = smul.addr %s321, 4
        %s323 = scalar_lea.vmem [#allocation7], %s322
        // Predicated region
        $region49: #{tpu_custom_call.1} parent=39 // pred_check
          %p324 = pneg %p158
        $region50: #{tpu_custom_call.1} parent=39 // pred_check_branch
          %326 = sbr.rel (%p324) target = $region52
        $region51: #{tpu_custom_call.1} parent=39 // pred_region
          %s328 = ssub.s32 64, 64
          %329 = vsyncadd %s320, %s328
          %s330 = smul.addr %s25, 64
          %s331 = scalar_lea.hbm %s5, %s330
          %s333 = sshll.u32 %s323, 4
          %s334 = int_to_ptr.vmem [resolvable:$true] %s333
          %336 = dma.vmem_to_hbm [thread:$0]  %s334, 64, %s331, %s320
        $region52: #{tpu_custom_call.1} parent=39 // pred_fallthru
          _
      $region40: #{tpu_custom_call.1} parent=5 // pred_fallthru
        _
      %p337 = scmp.le.s32.totalorder 2, %s20
      // Predicated region
      $region53: #{tpu_custom_call.1} parent=5 // pred_check
        %p338 = pneg %p337
      $region54: #{tpu_custom_call.1} parent=5 // pred_check_branch
        %340 = sbr.rel (%p338) target = $region56
      $region55: #{tpu_custom_call.1} parent=5 // pred_region
        %s341 = ssub.s32 %s20, 2
        // Predicated region
        $region57: #{tpu_custom_call.1} parent=55 // pred_check
          %p342 = pneg %p164
        $region58: #{tpu_custom_call.1} parent=55 // pred_check_branch
          %344 = sbr.rel (%p342) target = $region60
        $region59: #{tpu_custom_call.1} parent=55 // pred_region
          %s345 = sand.u32 %s149, 1
          %s346 = scalar_lea.sflag [#allocation4], %s345
          %s347 = sand.u32 %s149, 1
          %s348 = smul.addr %s347, 4
          %s349 = scalar_lea.vmem [#allocation7], %s348
          %350 = dma.done %s346, 64
        $region60: #{tpu_custom_call.1} parent=55 // pred_fallthru
          _
      $region56: #{tpu_custom_call.1} parent=5 // pred_fallthru
        _
    $region6: #{tpu_custom_call.1} parent=1 // loop_footer
      %s24 = sadd.s32 1, %s20
    $region7: #{tpu_custom_call.1} parent=1 // loop_footer_branch
      %19 = sbr.rel target = $region3
    $region8: #{tpu_custom_call.1} parent=1 // loop_exit
      _
    %351 = vsyncpa [#allocation3], 1
    %s352 = scalar_lea.sflag [#allocation3], 1
    %353 = vsyncpa %s352, 1
    %354 = vsyncpa [#allocation6], 1
    %s355 = scalar_lea.sflag [#allocation6], 1
    %356 = vsyncpa %s355, 1
    %357 = vsyncpa [#allocation4], 1
    %s358 = scalar_lea.sflag [#allocation4], 1
    %359 = vsyncpa %s358, 1

</llo_original>
